<compile_context>
chip_gen: v5e
topology: v5e:2x2
jax: 0.10.0
libtpu: 0.0.40
codegen_flags: <defaults>
</compile_context>

<pallas_src>
import functools

import jax
import jax.numpy as jnp
from jax.experimental import pallas as pl
from jax.experimental.pallas import tpu as pltpu


def _gradient_loss_kernel(s_ref, mask_ref, out_ref, acc_dx, acc_dy, acc_dz,
                          *, W, penalty):
    """One grid step handles a (tb, D, H*W) block of the (N*C, D, H*W) tensor.

    mask_ref: (1, H*W) f32, 1.0 where a stride-1 lane pair stays inside an
              H-row, 0.0 where it straddles two rows (applied once, in finalize).
    acc_dx / acc_dy / acc_dz: (D, H*W) f32 VMEM accumulators.
    out_ref: (1, 3) SMEM block -> raw [sum(dx), sum(dy), sum(dz)] partial sums.
    """
    i = pl.program_id(1)

    @pl.when(i == 0)
    def _init():
        acc_dx[...] = jnp.zeros_like(acc_dx)
        acc_dy[...] = jnp.zeros_like(acc_dy)
        acc_dz[...] = jnp.zeros_like(acc_dz)

    x = s_ref[...].astype(jnp.float32)  # (tb, D, HW)
    tb, D, HW = x.shape

    if penalty == "l2":
        pen = lambda d: d * d  # (a-b)^2 == |a-b|^2 -> abs is redundant
    else:
        pen = jnp.abs

    if HW > W:  # H > 1
        # dx: diff along H == stride-W shift along the flattened lane axis.
        dx = pen(x[:, :, W:] - x[:, :, : HW - W])            # (tb, D, HW-W)
        acc_dx[:, : HW - W] += jnp.sum(dx, axis=0)

    if D > 1:
        # dy: diff along D (sublane axis of the block).
        dy = pen(x[:, 1:, :] - x[:, :-1, :])                 # (tb, D-1, HW)
        acc_dy[: D - 1, :] += jnp.sum(dy, axis=0)

    if W > 1:
        # dz: diff along W == stride-1 lane shift.  Accumulate UNMASKED here;
        # pairs straddling H-row boundaries are zeroed once in finalize.
        dz = pen(x[:, :, 1:] - x[:, :, : HW - 1])            # (tb, D, HW-1)
        acc_dz[:, : HW - 1] += jnp.sum(dz, axis=0)

    @pl.when(i == pl.num_programs(1) - 1)
    def _finalize():
        out_ref[0, 0] = jnp.sum(acc_dx[...])
        out_ref[0, 1] = jnp.sum(acc_dy[...])
        # Row-boundary mask applied exactly once (broadcast (1,HW) over (D,HW)).
        out_ref[0, 2] = jnp.sum(acc_dz[...] * mask_ref[...])


def _largest_divisor_under(n, bytes_per_unit, max_bytes):
    """Largest divisor d of n with d * bytes_per_unit <= max_bytes (>= 1)."""
    best = 1
    for d in range(1, n + 1):
        if n % d == 0 and d * bytes_per_unit <= max_bytes:
            best = d
    return best


def gradient_loss(s, penalty="l2", *, max_block_bytes=2 * 1024 * 1024):
    """Pallas equivalent of gradient_loss.forward(s, penalty)."""
    N, C, D, H, W = s.shape
    NC = N * C
    HW = H * W

    # Free (contiguous) reshape: lane axis becomes H*W for full vreg density.
    # Input is kept in its original dtype; the kernel upcasts per block.
    s2 = s.reshape(NC, D, HW)

    # 0/1 mask over the flattened lane axis: position l is a valid W-direction
    # pair iff l % W != W-1 (i.e. it does not straddle two H rows).
    w_idx = jnp.arange(HW, dtype=jnp.int32) % W
    dz_mask = (w_idx != (W - 1)).astype(jnp.float32).reshape(1, HW)

    slab_bytes = D * HW * s2.dtype.itemsize
    tb = _largest_divisor_under(NC, slab_bytes, max_block_bytes)
    # TODO(synk): for single (D, H*W) slabs larger than the VMEM budget (very
    # large volumes), additionally tile D with a 1-slice halo carry.
    n_blocks = NC // tb
    n_par = 2 if n_blocks % 2 == 0 else 1   # split across TensorCores when possible
    inner = n_blocks // n_par

    kernel = functools.partial(_gradient_loss_kernel, W=W, penalty=penalty)

    partials = pl.pallas_call(
        kernel,
        out_shape=jax.ShapeDtypeStruct((n_par, 3), jnp.float32),
        grid_spec=pltpu.PrefetchScalarGridSpec(
            num_scalar_prefetch=0,
            grid=(n_par, inner),
            in_specs=[
                pl.BlockSpec((tb, D, HW), lambda c, i: (c * inner + i, 0, 0)),
                pl.BlockSpec((1, HW), lambda c, i: (0, 0)),   # mask: DMA'd once
            ],
            out_specs=pl.BlockSpec(
                (1, 3), lambda c, i: (c, 0), memory_space=pltpu.SMEM
            ),
            scratch_shapes=[
                pltpu.VMEM((D, HW), jnp.float32),   # dx accumulator
                pltpu.VMEM((D, HW), jnp.float32),   # dy accumulator
                pltpu.VMEM((D, HW), jnp.float32),   # dz accumulator
            ],
        ),
        compiler_params=pltpu.CompilerParams(
            dimension_semantics=("parallel", "arbitrary"),
            vmem_limit_bytes=48 * 1024 * 1024,
        ),
    )(s2, dz_mask)

    sums = jnp.sum(partials, axis=0)  # [sum(dx), sum(dy), sum(dz)]
    cx = N * C * D * (H - 1) * W
    cy = N * C * (D - 1) * H * W
    cz = N * C * D * H * (W - 1)
    # Note: degenerate dims (D/H/W == 1) give 0/0 -> NaN, matching torch.mean
    # of an empty tensor in the reference.
    return (sums[0] / cx + sums[1] / cy + sums[2] / cz) / 3.0


def _gradient_loss_ref(s, penalty="l2"):
    """Pure-JAX reference matching the PyTorch forward exactly."""
    s = s.astype(jnp.float32)
    dy = jnp.abs(s[:, :, 1:, :, :] - s[:, :, :-1, :, :])
    dx = jnp.abs(s[:, :, :, 1:, :] - s[:, :, :, :-1, :])
    dz = jnp.abs(s[:, :, :, :, 1:] - s[:, :, :, :, :-1])
    if penalty == "l2":
        dy, dx, dz = dy * dy, dx * dx, dz * dz
    return (jnp.mean(dx) + jnp.mean(dy) + jnp.mean(dz)) / 3.0


if __name__ == "__main__":
    key = jax.random.PRNGKey(0)

    # Shape 1: lane-aligned volume.  Shape 2: odd sizes exercising the
    # row-boundary mask and non-(8,128)-multiple full-extent blocks.
    shapes = [(2, 4, 8, 8, 16), (2, 3, 4, 5, 6)]
    for shape in shapes:
        key, sub = jax.random.split(key)
        s = jax.random.normal(sub, shape, dtype=jnp.float32)
        for penalty in ("l2", "l1"):
            ref = _gradient_loss_ref(s, penalty)
            out = jax.block_until_ready(gradient_loss(s, penalty))
            assert jnp.allclose(out, ref, rtol=1e-5, atol=1e-6), (shape, penalty, out, ref)

    # Forced tiny blocks: one slab per step -> exercises multi-step
    # accumulation and the 2-way parallel grid axis (grid (2, 4)).
    s = jax.random.normal(jax.random.PRNGKey(0), (2, 4, 8, 8, 16), dtype=jnp.float32)
    for penalty in ("l2", "l1"):
        ref = _gradient_loss_ref(s, penalty)
        out_small = jax.block_until_ready(
            gradient_loss(s, penalty, max_block_bytes=8 * 8 * 16 * 4)
        )
        assert jnp.allclose(out_small, ref, rtol=1e-5, atol=1e-6), (penalty, out_small, ref)

    print("KERNEL_OK")
</pallas_src>

<mosaic_0001>
module attributes {stable_mosaic.version = 11 : i64} {
  func.func @_gradient_loss_kernel(%arg0: i32, %arg1: i32, %arg2: memref<8x8x128xf32, #tpu.memory_space<vmem>>, %arg3: memref<1x128xf32, #tpu.memory_space<vmem>>, %arg4: memref<1x3xf32, #tpu.memory_space<smem>>, %arg5: memref<8x128xf32, #tpu.memory_space<vmem>>, %arg6: memref<8x128xf32, #tpu.memory_space<vmem>>, %arg7: memref<8x128xf32, #tpu.memory_space<vmem>>) attributes {dimension_semantics = [#tpu.dimension_semantics<parallel>, #tpu.dimension_semantics<arbitrary>], iteration_bounds = array<i64: 1, 1>, scalar_prefetch = 0 : i64, scratch_operands = 3 : i64, tpu.core_type = #tpu.core_type<tc>, window_params = [{transform_indices = @transform_0, window_bounds = array<i64: 8, 8, 128>}, {pipeline_mode = #tpu.pipeline_mode<synchronous>, transform_indices = @transform_1, window_bounds = array<i64: 1, 128>}, {transform_indices = @transform_2, window_bounds = array<i64: 1, 3>}]} {
    %c0_i32 = arith.constant 0 : i32
    %0 = arith.cmpi eq, %arg1, %c0_i32 : i32
    %1 = arith.extui %0 : i1 to i32
    %c0_i32_0 = arith.constant 0 : i32
    %2 = arith.cmpi ne, %1, %c0_i32_0 : i32
    scf.if %2 {
      %cst_19 = arith.constant 0.000000e+00 : f32
      %31 = vector.broadcast %cst_19 : f32 to vector<8x128xf32>
      %c0_20 = arith.constant 0 : index
      %c0_21 = arith.constant 0 : index
      %32 = vector.load %arg5[%c0_20, %c0_21] : memref<8x128xf32, #tpu.memory_space<vmem>>, vector<8x128xf32>
      tpu.vector_store %arg5[%c0_20, %c0_21], %31 {strides = array<i32>} : memref<8x128xf32, #tpu.memory_space<vmem>>, vector<8x128xf32>,
      %cst_22 = arith.constant 0.000000e+00 : f32
      %33 = vector.broadcast %cst_22 : f32 to vector<8x128xf32>
      %c0_23 = arith.constant 0 : index
      %c0_24 = arith.constant 0 : index
      %34 = vector.load %arg6[%c0_23, %c0_24] : memref<8x128xf32, #tpu.memory_space<vmem>>, vector<8x128xf32>
      tpu.vector_store %arg6[%c0_23, %c0_24], %33 {strides = array<i32>} : memref<8x128xf32, #tpu.memory_space<vmem>>, vector<8x128xf32>,
      %cst_25 = arith.constant 0.000000e+00 : f32
      %35 = vector.broadcast %cst_25 : f32 to vector<8x128xf32>
      %c0_26 = arith.constant 0 : index
      %c0_27 = arith.constant 0 : index
      %36 = vector.load %arg7[%c0_26, %c0_27] : memref<8x128xf32, #tpu.memory_space<vmem>>, vector<8x128xf32>
      tpu.vector_store %arg7[%c0_26, %c0_27], %35 {strides = array<i32>} : memref<8x128xf32, #tpu.memory_space<vmem>>, vector<8x128xf32>,
    } else {
    }
    %c0 = arith.constant 0 : index
    %c0_1 = arith.constant 0 : index
    %c0_2 = arith.constant 0 : index
    %3 = vector.load %arg2[%c0, %c0_1, %c0_2] : memref<8x8x128xf32, #tpu.memory_space<vmem>>, vector<8x8x128xf32>
    %4 = vector.extract_strided_slice %3 {offsets = [0, 0, 16], sizes = [8, 8, 112], strides = [1, 1, 1]} : vector<8x8x128xf32> to vector<8x8x112xf32>
    %5 = vector.extract_strided_slice %3 {offsets = [0, 0, 0], sizes = [8, 8, 112], strides = [1, 1, 1]} : vector<8x8x128xf32> to vector<8x8x112xf32>
    %6 = arith.subf %4, %5 : vector<8x8x112xf32>
    %7 = arith.mulf %6, %6 : vector<8x8x112xf32>
    %c0_3 = arith.constant 0 : index
    %c0_4 = arith.constant 0 : index
    %8 = vector.load %arg5[%c0_3, %c0_4] : memref<8x128xf32, #tpu.memory_space<vmem>>, vector<8x112xf32>
    %cst = arith.constant dense<0.000000e+00> : vector<8x112xf32>
    %9 = vector.multi_reduction <add>, %7, %cst [0] : vector<8x8x112xf32> to vector<8x112xf32>
    %10 = arith.addf %8, %9 : vector<8x112xf32>
    %c0_5 = arith.constant 0 : index
    %c0_6 = arith.constant 0 : index
    %11 = vector.load %arg5[%c0_5, %c0_6] : memref<8x128xf32, #tpu.memory_space<vmem>>, vector<8x112xf32>
    tpu.vector_store %arg5[%c0_5, %c0_6], %10 {strides = array<i32>} : memref<8x128xf32, #tpu.memory_space<vmem>>, vector<8x112xf32>,
    %12 = vector.extract_strided_slice %3 {offsets = [0, 1, 0], sizes = [8, 7, 128], strides = [1, 1, 1]} : vector<8x8x128xf32> to vector<8x7x128xf32>
    %13 = vector.extract_strided_slice %3 {offsets = [0, 0, 0], sizes = [8, 7, 128], strides = [1, 1, 1]} : vector<8x8x128xf32> to vector<8x7x128xf32>
    %14 = arith.subf %12, %13 : vector<8x7x128xf32>
    %15 = arith.mulf %14, %14 : vector<8x7x128xf32>
    %c0_7 = arith.constant 0 : index
    %c0_8 = arith.constant 0 : index
    %16 = vector.load %arg6[%c0_7, %c0_8] : memref<8x128xf32, #tpu.memory_space<vmem>>, vector<7x128xf32>
    %cst_9 = arith.constant dense<0.000000e+00> : vector<7x128xf32>
    %17 = vector.multi_reduction <add>, %15, %cst_9 [0] : vector<8x7x128xf32> to vector<7x128xf32>
    %18 = arith.addf %16, %17 : vector<7x128xf32>
    %c0_10 = arith.constant 0 : index
    %c0_11 = arith.constant 0 : index
    %19 = vector.load %arg6[%c0_10, %c0_11] : memref<8x128xf32, #tpu.memory_space<vmem>>, vector<7x128xf32>
    tpu.vector_store %arg6[%c0_10, %c0_11], %18 {strides = array<i32>} : memref<8x128xf32, #tpu.memory_space<vmem>>, vector<7x128xf32>,
    %20 = vector.extract_strided_slice %3 {offsets = [0, 0, 1], sizes = [8, 8, 127], strides = [1, 1, 1]} : vector<8x8x128xf32> to vector<8x8x127xf32>
    %21 = vector.extract_strided_slice %3 {offsets = [0, 0, 0], sizes = [8, 8, 127], strides = [1, 1, 1]} : vector<8x8x128xf32> to vector<8x8x127xf32>
    %22 = arith.subf %20, %21 : vector<8x8x127xf32>
    %23 = arith.mulf %22, %22 : vector<8x8x127xf32>
    %c0_12 = arith.constant 0 : index
    %c0_13 = arith.constant 0 : index
    %24 = vector.load %arg7[%c0_12, %c0_13] : memref<8x128xf32, #tpu.memory_space<vmem>>, vector<8x127xf32>
    %cst_14 = arith.constant dense<0.000000e+00> : vector<8x127xf32>
    %25 = vector.multi_reduction <add>, %23, %cst_14 [0] : vector<8x8x127xf32> to vector<8x127xf32>
    %26 = arith.addf %24, %25 : vector<8x127xf32>
    %c0_15 = arith.constant 0 : index
    %c0_16 = arith.constant 0 : index
    %27 = vector.load %arg7[%c0_15, %c0_16] : memref<8x128xf32, #tpu.memory_space<vmem>>, vector<8x127xf32>
    tpu.vector_store %arg7[%c0_15, %c0_16], %26 {strides = array<i32>} : memref<8x128xf32, #tpu.memory_space<vmem>>, vector<8x127xf32>,
    %c0_i32_17 = arith.constant 0 : i32
    %28 = arith.cmpi eq, %arg1, %c0_i32_17 : i32
    %29 = arith.extui %28 : i1 to i32
    %c0_i32_18 = arith.constant 0 : i32
    %30 = arith.cmpi ne, %29, %c0_i32_18 : i32
    scf.if %30 {
      %c0_19 = arith.constant 0 : index
      %c0_20 = arith.constant 0 : index
      %31 = vector.load %arg5[%c0_19, %c0_20] : memref<8x128xf32, #tpu.memory_space<vmem>>, vector<8x128xf32>
      %32 = vector.shape_cast %31 : vector<8x128xf32> to vector<1x8x128xf32>
      %cst_21 = arith.constant dense<0.000000e+00> : vector<1xf32>
      %33 = vector.multi_reduction <add>, %32, %cst_21 [1, 2] : vector<1x8x128xf32> to vector<1xf32>
      %34 = vector.shape_cast %33 : vector<1xf32> to vector<1x1x1xf32>
      %35 = vector.extract %34[0, 0, 0] : f32 from vector<1x1x1xf32>
      %c0_22 = arith.constant 0 : index
      %c0_23 = arith.constant 0 : index
      %36 = memref.load %arg4[%c0_22, %c0_23] : memref<1x3xf32, #tpu.memory_space<smem>>
      memref.store %35, %arg4[%c0_22, %c0_23] : memref<1x3xf32, #tpu.memory_space<smem>>
      %c0_24 = arith.constant 0 : index
      %c0_25 = arith.constant 0 : index
      %37 = vector.load %arg6[%c0_24, %c0_25] : memref<8x128xf32, #tpu.memory_space<vmem>>, vector<8x128xf32>
      %38 = vector.shape_cast %37 : vector<8x128xf32> to vector<1x8x128xf32>
      %cst_26 = arith.constant dense<0.000000e+00> : vector<1xf32>
      %39 = vector.multi_reduction <add>, %38, %cst_26 [1, 2] : vector<1x8x128xf32> to vector<1xf32>
      %40 = vector.shape_cast %39 : vector<1xf32> to vector<1x1x1xf32>
      %41 = vector.extract %40[0, 0, 0] : f32 from vector<1x1x1xf32>
      %c0_27 = arith.constant 0 : index
      %c1 = arith.constant 1 : index
      %42 = memref.load %arg4[%c0_27, %c1] : memref<1x3xf32, #tpu.memory_space<smem>>
      memref.store %41, %arg4[%c0_27, %c1] : memref<1x3xf32, #tpu.memory_space<smem>>
      %c0_28 = arith.constant 0 : index
      %c0_29 = arith.constant 0 : index
      %43 = vector.load %arg7[%c0_28, %c0_29] : memref<8x128xf32, #tpu.memory_space<vmem>>, vector<8x128xf32>
      %c0_30 = arith.constant 0 : index
      %c0_31 = arith.constant 0 : index
      %44 = vector.load %arg3[%c0_30, %c0_31] : memref<1x128xf32, #tpu.memory_space<vmem>>, vector<1x128xf32>
      %45 = vector.broadcast %44 : vector<1x128xf32> to vector<8x128xf32>
      %46 = arith.mulf %43, %45 : vector<8x128xf32>
      %47 = vector.shape_cast %46 : vector<8x128xf32> to vector<1x8x128xf32>
      %cst_32 = arith.constant dense<0.000000e+00> : vector<1xf32>
      %48 = vector.multi_reduction <add>, %47, %cst_32 [1, 2] : vector<1x8x128xf32> to vector<1xf32>
      %49 = vector.shape_cast %48 : vector<1xf32> to vector<1x1x1xf32>
      %50 = vector.extract %49[0, 0, 0] : f32 from vector<1x1x1xf32>
      %c0_33 = arith.constant 0 : index
      %c2 = arith.constant 2 : index
      %51 = memref.load %arg4[%c0_33, %c2] : memref<1x3xf32, #tpu.memory_space<smem>>
      memref.store %50, %arg4[%c0_33, %c2] : memref<1x3xf32, #tpu.memory_space<smem>>
    } else {
    }
    return
  }
  func.func @transform_0(%arg0: i32, %arg1: i32) -> (i32, i32, i32) {
    %c1_i32 = arith.constant 1 : i32
    %0 = arith.muli %arg0, %c1_i32 : i32
    %1 = arith.addi %0, %arg1 : i32
    %c0_i32 = arith.constant 0 : i32
    %c0_i32_0 = arith.constant 0 : i32
    %c0_i32_1 = arith.constant 0 : i32
    return %1, %c0_i32, %c0_i32_0 : i32, i32, i32
  }
  func.func @transform_1(%arg0: i32, %arg1: i32) -> (i32, i32) {
    %c0_i32 = arith.constant 0 : i32
    %c0_i32_0 = arith.constant 0 : i32
    %c0_i32_1 = arith.constant 0 : i32
    return %c0_i32, %c0_i32_0 : i32, i32
  }
  func.func @transform_2(%arg0: i32, %arg1: i32) -> (i32, i32) {
    %c0_i32 = arith.constant 0 : i32
    %c0_i32_0 = arith.constant 0 : i32
    return %arg0, %c0_i32 : i32, i32
  }
}

</mosaic_0001>

<llo_original>
// kernel: tpu_custom_call.1
$region0: #{tpu_custom_call.1}
  #allocation0 [shape = 'u32[]', space=smem, size = 0x4, offset = 0x4, fixed_abs, tag = 'smem constant byte address 0x4 - core index']
  #allocation1 [shape = 'u32[72,128]{1,0:T(1,128)}', space=vmem, size = 0x9000, scoped, tag = 'internal scratch']
  #allocation2 [shape = 'f32[8,128]{1,0:T(8,128)}', space=vmem, size = 0x1000, scoped, tag = 'scratch operand']
  #allocation3 [shape = 'f32[8,128]{1,0:T(8,128)}', space=vmem, size = 0x1000, scoped, tag = 'scratch operand']
  #allocation4 [shape = 'f32[8,128]{1,0:T(8,128)}', space=vmem, size = 0x1000, scoped, tag = 'scratch operand']
  %s0 = inlined_call_operand.hbm [shape: f32[8,8,128], index: 0, kind: input, shape index: {}]
  %s1 = inlined_call_operand.hbm [shape: f32[1,128], index: 1, kind: input, shape index: {}]
  %s2 = inlined_call_operand.hbm [shape: f32[1,3], index: 2, kind: output, shape index: {}]
  %s3 = sld [smem:[#allocation0]]
  $region34: #{tpu_custom_call.1} parent=0
    _
  %s5 = ssub.s32 1, %s3
  %s6 = scalar_select 0, %s5, %s3
  $region1: #{tpu_custom_call.1} parent=0
    #allocation5 [shape = 'u8[32768]{0}', space=vmem, size = 0x8000, scoped, tag = 'input window, operand 0, single buffered']
    #allocation6 [shape = 's32[1]{0}', space=sflag, size = 0x4, scoped, tag = 'scoped memory for tpu_custom_call.1']
    #allocation7 [shape = 's32[1]{0}', space=sflag, size = 0x4, scoped, tag = 'scoped memory for tpu_custom_call.1']
    #allocation8 [shape = 'u8[512]{0}', space=vmem, size = 0x400, scoped, tag = 'input window, operand 1, single buffered']
    #allocation9 [shape = 's32[1]{0}', space=sflag, size = 0x4, scoped, tag = 'scoped memory for tpu_custom_call.1']
    #allocation10 [shape = 'u8[512]{0}', space=smem, size = 0x200, scoped, tag = 'output window, operand 0, single buffered']
    %7 = vsyncpa [#allocation6], 0
    %8 = vsyncpa [#allocation9], 0
    %9 = vsyncpa [#allocation7], 0
    // Predicated region
    $region2: #{tpu_custom_call.1} parent=1 // pred_check
      _
    $region3: #{tpu_custom_call.1} parent=1 // pred_check_branch
      %11 = sbr.rel (0) target = $region5
    $region4: #{tpu_custom_call.1} parent=1 // pred_region
      %s12 = sadd.s32 0, 0
      %s13 = smul.u32 8, %s12
      %15 = vsyncadd [#allocation6], 0
      %s16 = smul.addr %s13, 8
      %s17 = scalar_lea.hbm %s0, %s16
      %s18 = sshll.u32 %s17, 4
      %s19 = int_to_ptr.hbm [resolvable:$true] %s18
      %s20 = sshll.u32 [#allocation5], 4
      %s21 = int_to_ptr.vmem [resolvable:$true] %s20
      %26 = dma.hbm_to_vmem [thread:$0]  %s19, 1024, %s21, [#allocation6], 128, 128, 8
    $region5: #{tpu_custom_call.1} parent=1 // pred_fallthru
      _
    // Predicated region
    $region6: #{tpu_custom_call.1} parent=1 // pred_check
      _
    $region7: #{tpu_custom_call.1} parent=1 // pred_check_branch
      %28 = sbr.rel (0) target = $region9
    $region8: #{tpu_custom_call.1} parent=1 // pred_region
      %30 = vsyncadd [#allocation9], 0
      %s32 = sshll.u32 %s1, 4
      %s33 = int_to_ptr.hbm [resolvable:$true] %s32
      %s34 = sshll.u32 [#allocation8], 4
      %s35 = int_to_ptr.vmem [resolvable:$true] %s34
      %37 = dma.hbm_to_vmem [thread:$0]  %s33, 16, %s35, [#allocation9]
    $region9: #{tpu_custom_call.1} parent=1 // pred_fallthru
      _
    // Predicated region
    $region10: #{tpu_custom_call.1} parent=1 // pred_check
      _
    $region11: #{tpu_custom_call.1} parent=1 // pred_check_branch
      %39 = sbr.rel (0) target = $region13
    $region12: #{tpu_custom_call.1} parent=1 // pred_region
      %41 = dma.done [#allocation6], 1024
    $region13: #{tpu_custom_call.1} parent=1 // pred_fallthru
      _
    // Predicated region
    $region14: #{tpu_custom_call.1} parent=1 // pred_check
      _
    $region15: #{tpu_custom_call.1} parent=1 // pred_check_branch
      %43 = sbr.rel (0) target = $region17
    $region16: #{tpu_custom_call.1} parent=1 // pred_region
      %45 = dma.done [#allocation9], 16
    $region17: #{tpu_custom_call.1} parent=1 // pred_fallthru
      _
    %s46 = sadd.s32 0, 0
    %s47 = smul.u32 8, %s46
    %p48 = scmp.eq.s32.totalorder 0, 0
    // Predicated region
    $region18: #{tpu_custom_call.1} parent=1 // pred_check
      %p49 = pneg %p48
    $region19: #{tpu_custom_call.1} parent=1 // pred_check_branch
      %51 = sbr.rel (%p49) target = $region21
    $region20: #{tpu_custom_call.1} parent=1 // pred_region
      %52 = vst [vmem:[#allocation2] sm:$0xff] 0.0
      %53 = vst [vmem:[#allocation3] sm:$0xff] 0.0
      %54 = vst [vmem:[#allocation4] sm:$0xff] 0.0
    $region21: #{tpu_custom_call.1} parent=1 // pred_fallthru
      _
    %v55 = vld [vmem:[#allocation5] sm:$0xff]
    %v56 = vld [vmem:[#allocation5 + $0x8] sm:$0xff]
    %v57 = vld [vmem:[#allocation5 + $0x10] sm:$0xff]
    %v58 = vld [vmem:[#allocation5 + $0x18] sm:$0xff]
    %v59 = vld [vmem:[#allocation5 + $0x20] sm:$0xff]
    %v60 = vld [vmem:[#allocation5 + $0x28] sm:$0xff]
    %v61 = vld [vmem:[#allocation5 + $0x30] sm:$0xff]
    %v62 = vld [vmem:[#allocation5 + $0x38] sm:$0xff]
    %71 = vrot.lane.b32.xlu0 %v55, 16
    %v72 = vpop.permute.xlu0 %71
    %73 = vrot.lane.b32.xlu0 %v56, 16
    %v74 = vpop.permute.xlu0 %73
    %75 = vrot.lane.b32.xlu0 %v57, 16
    %v76 = vpop.permute.xlu0 %75
    %77 = vrot.lane.b32.xlu0 %v58, 16
    %v78 = vpop.permute.xlu0 %77
    %79 = vrot.lane.b32.xlu0 %v59, 16
    %v80 = vpop.permute.xlu0 %79
    %81 = vrot.lane.b32.xlu0 %v60, 16
    %v82 = vpop.permute.xlu0 %81
    %83 = vrot.lane.b32.xlu0 %v61, 16
    %v84 = vpop.permute.xlu0 %83
    %85 = vrot.lane.b32.xlu0 %v62, 16
    %v86 = vpop.permute.xlu0 %85
    %v95 = vsub.f32 %v55, %v72
    %v96 = vsub.f32 %v56, %v74
    %v97 = vsub.f32 %v57, %v76
    %v98 = vsub.f32 %v58, %v78
    %v99 = vsub.f32 %v59, %v80
    %v100 = vsub.f32 %v60, %v82
    %v101 = vsub.f32 %v61, %v84
    %v102 = vsub.f32 %v62, %v86
    %v103 = vmul.f32 %v95, %v95
    %v104 = vmul.f32 %v96, %v96
    %v105 = vmul.f32 %v97, %v97
    %v106 = vmul.f32 %v98, %v98
    %v107 = vmul.f32 %v99, %v99
    %v108 = vmul.f32 %v100, %v100
    %v109 = vmul.f32 %v101, %v101
    %v110 = vmul.f32 %v102, %v102
    %v111 = vld [vmem:[#allocation2] sm:$0xff]
    %vm112 = vcmask 1047680
    %v113 = vsel %vm112, %v103, 0.0
    %v114 = vsel %vm112, %v104, 0.0
    %v115 = vadd.f32 %v113, %v114
    %v116 = vsel %vm112, %v105, 0.0
    %v117 = vadd.f32 %v115, %v116
    %v118 = vsel %vm112, %v106, 0.0
    %v119 = vadd.f32 %v117, %v118
    %v120 = vsel %vm112, %v107, 0.0
    %v121 = vadd.f32 %v119, %v120
    %v122 = vsel %vm112, %v108, 0.0
    %v123 = vadd.f32 %v121, %v122
    %v124 = vsel %vm112, %v109, 0.0
    %v125 = vadd.f32 %v123, %v124
    %v126 = vsel %vm112, %v110, 0.0
    %v127 = vadd.f32 %v125, %v126
    %129 = vrot.lane.b32.xlu0 %v127, 112
    %v130 = vpop.permute.xlu0 %129
    %v132 = vadd.f32 %v111, %v130
    %vm133 = vcmask 916480
    %134 = vst.msk [vmem:[#allocation2] sm:$0xff] %vm133, %v132
    %v135 = vrot.slane %v55, 7
    %v136 = vrot.slane %v56, 7
    %v137 = vrot.slane %v57, 7
    %v138 = vrot.slane %v58, 7
    %v139 = vrot.slane %v59, 7
    %v140 = vrot.slane %v60, 7
    %v141 = vrot.slane %v61, 7
    %v142 = vrot.slane %v62, 7
    %v151 = vsub.f32 %v55, %v135
    %v152 = vsub.f32 %v56, %v136
    %v153 = vsub.f32 %v57, %v137
    %v154 = vsub.f32 %v58, %v138
    %v155 = vsub.f32 %v59, %v139
    %v156 = vsub.f32 %v60, %v140
    %v157 = vsub.f32 %v61, %v141
    %v158 = vsub.f32 %v62, %v142
    %v159 = vmul.f32 %v151, %v151
    %v160 = vmul.f32 %v152, %v152
    %v161 = vmul.f32 %v153, %v153
    %v162 = vmul.f32 %v154, %v154
    %v163 = vmul.f32 %v155, %v155
    %v164 = vmul.f32 %v156, %v156
    %v165 = vmul.f32 %v157, %v157
    %v166 = vmul.f32 %v158, %v158
    %v167 = vld [vmem:[#allocation3] sm:$0x7f]
    %vm168 = vcmask 1047553
    %v169 = vsel %vm168, %v159, 0.0
    %v170 = vsel %vm168, %v160, 0.0
    %v171 = vadd.f32 %v169, %v170
    %v172 = vsel %vm168, %v161, 0.0
    %v173 = vadd.f32 %v171, %v172
    %v174 = vsel %vm168, %v162, 0.0
    %v175 = vadd.f32 %v173, %v174
    %v176 = vsel %vm168, %v163, 0.0
    %v177 = vadd.f32 %v175, %v176
    %v178 = vsel %vm168, %v164, 0.0
    %v179 = vadd.f32 %v177, %v178
    %v180 = vsel %vm168, %v165, 0.0
    %v181 = vadd.f32 %v179, %v180
    %v182 = vsel %vm168, %v166, 0.0
    %v183 = vadd.f32 %v181, %v182
    %v185 = vrot.slane %v183, 1
    %v187 = vadd.f32 %v167, %v185
    %188 = vst [vmem:[#allocation3] sm:$0x7f] %v187
    %189 = vrot.lane.b32.xlu0 %v55, 1
    %v190 = vpop.permute.xlu0 %189
    %191 = vrot.lane.b32.xlu0 %v56, 1
    %v192 = vpop.permute.xlu0 %191
    %193 = vrot.lane.b32.xlu0 %v57, 1
    %v194 = vpop.permute.xlu0 %193
    %195 = vrot.lane.b32.xlu0 %v58, 1
    %v196 = vpop.permute.xlu0 %195
    %197 = vrot.lane.b32.xlu0 %v59, 1
    %v198 = vpop.permute.xlu0 %197
    %199 = vrot.lane.b32.xlu0 %v60, 1
    %v200 = vpop.permute.xlu0 %199
    %201 = vrot.lane.b32.xlu0 %v61, 1
    %v202 = vpop.permute.xlu0 %201
    %203 = vrot.lane.b32.xlu0 %v62, 1
    %v204 = vpop.permute.xlu0 %203
    %v213 = vsub.f32 %v55, %v190
    %v214 = vsub.f32 %v56, %v192
    %v215 = vsub.f32 %v57, %v194
    %v216 = vsub.f32 %v58, %v196
    %v217 = vsub.f32 %v59, %v198
    %v218 = vsub.f32 %v60, %v200
    %v219 = vsub.f32 %v61, %v202
    %v220 = vsub.f32 %v62, %v204
    %v221 = vmul.f32 %v213, %v213
    %v222 = vmul.f32 %v214, %v214
    %v223 = vmul.f32 %v215, %v215
    %v224 = vmul.f32 %v216, %v216
    %v225 = vmul.f32 %v217, %v217
    %v226 = vmul.f32 %v218, %v218
    %v227 = vmul.f32 %v219, %v219
    %v228 = vmul.f32 %v220, %v220
    %v229 = vld [vmem:[#allocation4] sm:$0xff]
    %vm230 = vcmask 1047560
    %v231 = vsel %vm230, %v221, 0.0
    %v232 = vsel %vm230, %v222, 0.0
    %v233 = vadd.f32 %v231, %v232
    %v234 = vsel %vm230, %v223, 0.0
    %v235 = vadd.f32 %v233, %v234
    %v236 = vsel %vm230, %v224, 0.0
    %v237 = vadd.f32 %v235, %v236
    %v238 = vsel %vm230, %v225, 0.0
    %v239 = vadd.f32 %v237, %v238
    %v240 = vsel %vm230, %v226, 0.0
    %v241 = vadd.f32 %v239, %v240
    %v242 = vsel %vm230, %v227, 0.0
    %v243 = vadd.f32 %v241, %v242
    %v244 = vsel %vm230, %v228, 0.0
    %v245 = vadd.f32 %v243, %v244
    %247 = vrot.lane.b32.xlu0 %v245, 127
    %v248 = vpop.permute.xlu0 %247
    %v250 = vadd.f32 %v229, %v248
    %vm251 = vcmask 1039360
    %252 = vst.msk [vmem:[#allocation4] sm:$0xff] %vm251, %v250
    // Predicated region
    $region22: #{tpu_custom_call.1} parent=1 // pred_check
      %p253 = pneg %p48
    $region23: #{tpu_custom_call.1} parent=1 // pred_check_branch
      %255 = sbr.rel (%p253) target = $region25
    $region24: #{tpu_custom_call.1} parent=1 // pred_region
      %v256 = vld [vmem:[#allocation2] sm:$0xff]
      %257 = vadd.xlane.f32.xlu0 %v256
      %v258 = vpop.xlane.xlu0 %257
      %v259 = vrot.slane %v258, 4
      %v260 = vadd.f32 %v258, %v259
      %v261 = vrot.slane %v260, 2
      %v262 = vadd.f32 %v260, %v261
      %v263 = vrot.slane %v262, 1
      %v264 = vadd.f32 %v262, %v263
      %s265 = vtos %v264
      %s266 = scalar_lea.smem [#allocation10], 0
      %267 = sst [smem:[%s266]] %s265
      %v268 = vld [vmem:[#allocation3] sm:$0xff]
      %269 = vadd.xlane.f32.xlu0 %v268
      %v270 = vpop.xlane.xlu0 %269
      %v271 = vrot.slane %v270, 4
      %v272 = vadd.f32 %v270, %v271
      %v273 = vrot.slane %v272, 2
      %v274 = vadd.f32 %v272, %v273
      %v275 = vrot.slane %v274, 1
      %v276 = vadd.f32 %v274, %v275
      %s277 = vtos %v276
      %s278 = scalar_lea.smem [#allocation10], 1
      %279 = sst [smem:[%s278]] %s277
      %v280 = vld [vmem:[#allocation4] sm:$0xff]
      %v281 = vld [vmem:[#allocation8] sm:$0x1]
      %v283 = vperm.slane %v281, 0
      %v285 = vmul.f32 %v280, %v283
      %286 = vadd.xlane.f32.xlu0 %v285
      %v287 = vpop.xlane.xlu0 %286
      %v288 = vrot.slane %v287, 4
      %v289 = vadd.f32 %v287, %v288
      %v290 = vrot.slane %v289, 2
      %v291 = vadd.f32 %v289, %v290
      %v292 = vrot.slane %v291, 1
      %v293 = vadd.f32 %v291, %v292
      %s294 = vtos %v293
      %s295 = scalar_lea.smem [#allocation10], 2
      %296 = sst [smem:[%s295]] %s294
    $region25: #{tpu_custom_call.1} parent=1 // pred_fallthru
      _
    // Predicated region
    $region26: #{tpu_custom_call.1} parent=1 // pred_check
      _
    $region27: #{tpu_custom_call.1} parent=1 // pred_check_branch
      %298 = sbr.rel (0) target = $region29
    $region28: #{tpu_custom_call.1} parent=1 // pred_region
      %300 = vsyncadd [#allocation7], 0
      %s302 = sshll.u32 %s2, 4
      %s303 = int_to_ptr.hbm [resolvable:$true] %s302
      %305 = dma.smem_to_hbm [#allocation10], 16, %s303, [#allocation7]
    $region29: #{tpu_custom_call.1} parent=1 // pred_fallthru
      _
    // Predicated region
    $region30: #{tpu_custom_call.1} parent=1 // pred_check
      _
    $region31: #{tpu_custom_call.1} parent=1 // pred_check_branch
      %307 = sbr.rel (0) target = $region33
    $region32: #{tpu_custom_call.1} parent=1 // pred_region
      %309 = dma.done [#allocation7], 16
    $region33: #{tpu_custom_call.1} parent=1 // pred_fallthru
      _
    %310 = sfence
    %311 = vsyncpa [#allocation6], 1
    %312 = vsyncpa [#allocation9], 1
    %313 = vsyncpa [#allocation7], 1

</llo_original>
